<compile_context>
chip_gen: v7x
topology: tpu7x:2x2x1
jax: 0.10.0
libtpu: 0.0.40
codegen_flags: <defaults>
</compile_context>

<pallas_src>
import jax
import jax.numpy as jnp
from jax import lax
from jax.experimental import pallas as pl
from jax.experimental.pallas import tpu as pltpu

KERNEL_SIZE = 3
PADDING = 1
LANES = 128
HALO = 128  # conv needs 2 extra columns; rounded up to one full lane tile.


def _unet_layer_kernel(x_ref, w_ref, b_ref, o_ref):
    # x_ref: (1, Cin, TL + HALO)  bf16 -- NCL input tile incl. zero-pad / halo columns
    # w_ref: (K, Cout, Cin)       bf16 -- conv taps with BN scale folded in
    # b_ref: (Cout, 1)            f32  -- folded conv-bias + BN shift
    # o_ref: (1, Cout, TL)        f32  -- NCL output tile (L on the lane axis)
    tl = o_ref.shape[2]
    x = x_ref[0]                                            # (Cin, TL + HALO)
    # Tap 0 initialises the accumulator (no zero-init + add pass).
    acc = jnp.dot(w_ref[0], x[:, 0:tl], preferred_element_type=jnp.float32)
    for k in range(1, KERNEL_SIZE):                         # static unroll, 3 taps
        acc = acc + jnp.dot(w_ref[k], x[:, k:k + tl],
                            preferred_element_type=jnp.float32)
    # Folded BN/conv bias + ReLU, f32 epilogue, lane-dense (Cout, TL) store.
    o_ref[0] = jnp.maximum(acc + b_ref[...], 0.0).astype(o_ref.dtype)


def unet_layer_forward(x_ncl, w_oik, conv_bias, gamma, beta,
                       running_mean, running_var, eps=1e-5, block_l=512):
    """Conv1d(k=3, s=1, p=1) + BatchNorm1d (inference) + ReLU.

    x_ncl: (N, Cin, L) float32  ->  (N, Cout, L) float32.
    block_l: L-tile size (multiple of 128). ~512-2048 on v5e/v6e, ~256-512 on v7x.
    """
    N, Cin, L = x_ncl.shape
    Cout, _, K = w_oik.shape
    assert K == KERNEL_SIZE

    # ---- fold BatchNorm (inference stats) and conv bias (wrapper-side, tiny) ----
    scale = (gamma / jnp.sqrt(running_var + eps)).astype(jnp.float32)         # (Cout,)
    bias = ((conv_bias - running_mean) * scale + beta).astype(jnp.float32)    # (Cout,)
    # (Cout, Cin, K) -> tap-major (K, Cout, Cin); BN scale folded along Cout; bf16.
    w_koi = (jnp.transpose(w_oik, (2, 0, 1)).astype(jnp.float32)
             * scale[None, :, None]).astype(jnp.bfloat16)
    bias_2d = bias.reshape(Cout, 1)

    # ---- L tiling (NCL layout kept: no NCL<->NLC transposes anywhere) ----
    block_l = max(LANES, (block_l // LANES) * LANES)
    if L <= block_l:
        tl, n_l = L, 1
    else:
        tl, n_l = block_l, pl.cdiv(L, block_l)

    # Zero-pad the length axis: 1 leading column (left conv pad) plus trailing zeros
    # covering the right conv pad, the round-up to n_l*tl, and the 128-column halo.
    l_pad_total = n_l * tl + HALO
    x_pad = jnp.pad(x_ncl.astype(jnp.bfloat16),
                    ((0, 0), (0, 0), (PADDING, l_pad_total - L - PADDING)))

    if n_l == 1:
        # Single tile spans the whole padded length -> plain blocked spec.
        x_spec = pl.BlockSpec((1, Cin, l_pad_total), lambda n, l: (n, 0, 0))
    else:
        # Overlapping halo windows: element-offset indexing on the L axis.
        # Offsets l*tl are lane-aligned (tl is a multiple of 128) and the block
        # width tl+HALO is a multiple of 128.
        x_spec = pl.BlockSpec((1, Cin, pl.Element(tl + HALO)),
                              lambda n, l: (n, 0, l * tl))

    w_spec = pl.BlockSpec((KERNEL_SIZE, Cout, Cin), lambda n, l: (0, 0, 0))
    b_spec = pl.BlockSpec((Cout, 1), lambda n, l: (0, 0))
    o_spec = pl.BlockSpec((1, Cout, tl), lambda n, l: (n, 0, l))

    # Explicit VMEM budget: 2 pipeline buffers per tiled operand, resident weights,
    # 2x headroom for in-kernel temporaries (shifted-slice copies, f32 accumulator).
    x_tile_bytes = Cin * (tl + HALO) * 2          # bf16
    o_tile_bytes = Cout * tl * 4                  # f32
    w_bytes = KERNEL_SIZE * Cout * Cin * 2 + Cout * 4
    vmem_limit = int(2.0 * (2 * (x_tile_bytes + o_tile_bytes) + 2 * w_bytes)) + (4 << 20)
    vmem_limit = min(max(vmem_limit, 16 << 20), 100 << 20)

    out = pl.pallas_call(
        _unet_layer_kernel,
        out_shape=jax.ShapeDtypeStruct((N, Cout, n_l * tl), jnp.float32),
        grid_spec=pltpu.PrefetchScalarGridSpec(
            num_scalar_prefetch=0,
            grid=(N, n_l),
            in_specs=[x_spec, w_spec, b_spec],
            out_specs=o_spec,
        ),
        compiler_params=pltpu.CompilerParams(
            dimension_semantics=("parallel", "parallel"),
            vmem_limit_bytes=vmem_limit,
        ),
    )(x_pad, w_koi, bias_2d)

    if n_l * tl != L:
        out = out[:, :, :L]
    return out


def _reference_forward(x_ncl, w_oik, conv_bias, gamma, beta,
                       running_mean, running_var, eps=1e-5):
    """Pure-JAX f32 reference (lax conv) for validation."""
    y = lax.conv_general_dilated(
        x_ncl, w_oik, window_strides=(1,), padding=((PADDING, PADDING),),
        dimension_numbers=("NCH", "OIH", "NCH"))
    y = y + conv_bias[None, :, None]
    y = (y - running_mean[None, :, None]) / jnp.sqrt(
        running_var[None, :, None] + eps)
    y = y * gamma[None, :, None] + beta[None, :, None]
    return jnp.maximum(y, 0.0)


if __name__ == "__main__":
    N, Cin, Cout, L = 2, 4, 8, 16

    key = jax.random.PRNGKey(0)
    k_x, k_w, k_b, k_g, k_be, k_m, k_v = jax.random.split(key, 7)

    x = jax.random.normal(k_x, (N, Cin, L), dtype=jnp.float32)
    # Conv1d weight shape in PyTorch: (out_channels, in_channels, kernel_size)
    w = jax.random.normal(k_w, (Cout, Cin, KERNEL_SIZE), dtype=jnp.float32) * 0.2
    b = jax.random.normal(k_b, (Cout,), dtype=jnp.float32) * 0.1
    gamma = 1.0 + 0.1 * jax.random.normal(k_g, (Cout,), dtype=jnp.float32)
    beta = 0.1 * jax.random.normal(k_be, (Cout,), dtype=jnp.float32)
    running_mean = 0.1 * jax.random.normal(k_m, (Cout,), dtype=jnp.float32)
    running_var = jnp.abs(1.0 + 0.1 * jax.random.normal(k_v, (Cout,),
                                                        dtype=jnp.float32))

    out = unet_layer_forward(x, w, b, gamma, beta, running_mean, running_var)
    out = jax.block_until_ready(out)

    ref = _reference_forward(x, w, b, gamma, beta, running_mean, running_var)
    assert out.shape == (N, Cout, L)
    # bf16 matmul inputs with f32 accumulation -> loosened tolerance vs f32 reference.
    assert jnp.allclose(out, ref, atol=5e-2, rtol=5e-2), float(
        jnp.max(jnp.abs(out - ref)))

    print("KERNEL_OK")
</pallas_src>

<mosaic_0001>
module attributes {stable_mosaic.version = 11 : i64} {
  func.func @_unet_layer_kernel(%arg0: i32, %arg1: i32, %arg2: memref<1x4x144xbf16, #tpu.memory_space<vmem>>, %arg3: memref<3x8x4xbf16, #tpu.memory_space<vmem>>, %arg4: memref<8x1xf32, #tpu.memory_space<vmem>>, %arg5: memref<1x8x16xf32, #tpu.memory_space<vmem>>) attributes {dimension_semantics = [#tpu.dimension_semantics<parallel>, #tpu.dimension_semantics<parallel>], iteration_bounds = array<i64: 2, 1>, scalar_prefetch = 0 : i64, scratch_operands = 0 : i64, tpu.core_type = #tpu.core_type<tc>, window_params = [{transform_indices = @transform_0, window_bounds = array<i64: 1, 4, 144>}, {pipeline_mode = #tpu.pipeline_mode<synchronous>, transform_indices = @transform_1, window_bounds = array<i64: 3, 8, 4>}, {pipeline_mode = #tpu.pipeline_mode<synchronous>, transform_indices = @transform_2, window_bounds = array<i64: 8, 1>}, {transform_indices = @transform_3, window_bounds = array<i64: 1, 8, 16>}]} {
    %c0 = arith.constant 0 : index
    %c0_0 = arith.constant 0 : index
    %c0_1 = arith.constant 0 : index
    %0 = vector.load %arg2[%c0, %c0_0, %c0_1] : memref<1x4x144xbf16, #tpu.memory_space<vmem>>, vector<1x4x144xbf16>
    %1 = vector.shape_cast %0 : vector<1x4x144xbf16> to vector<4x144xbf16>
    %c0_2 = arith.constant 0 : index
    %c0_3 = arith.constant 0 : index
    %c0_4 = arith.constant 0 : index
    %2 = vector.load %arg3[%c0_2, %c0_3, %c0_4] : memref<3x8x4xbf16, #tpu.memory_space<vmem>>, vector<1x8x4xbf16>
    %3 = vector.shape_cast %2 : vector<1x8x4xbf16> to vector<8x4xbf16>
    %4 = vector.extract_strided_slice %1 {offsets = [0, 0], sizes = [4, 16], strides = [1, 1]} : vector<4x144xbf16> to vector<4x16xbf16>
    %cst = arith.constant dense<0.000000e+00> : vector<8x16xf32>
    %5 = tpu.matmul %3, %4, %cst {dimension_numbers = #tpu.dot_dimension_numbers<[1], [0], [0], [1], [0, 0, 1, 1], [], []>} : vector<8x4xbf16>, vector<4x16xbf16>, vector<8x16xf32> -> vector<8x16xf32>
    %c1 = arith.constant 1 : index
    %c0_5 = arith.constant 0 : index
    %c0_6 = arith.constant 0 : index
    %6 = vector.load %arg3[%c1, %c0_5, %c0_6] : memref<3x8x4xbf16, #tpu.memory_space<vmem>>, vector<1x8x4xbf16>
    %7 = vector.shape_cast %6 : vector<1x8x4xbf16> to vector<8x4xbf16>
    %8 = vector.extract_strided_slice %1 {offsets = [0, 1], sizes = [4, 16], strides = [1, 1]} : vector<4x144xbf16> to vector<4x16xbf16>
    %cst_7 = arith.constant dense<0.000000e+00> : vector<8x16xf32>
    %9 = tpu.matmul %7, %8, %cst_7 {dimension_numbers = #tpu.dot_dimension_numbers<[1], [0], [0], [1], [0, 0, 1, 1], [], []>} : vector<8x4xbf16>, vector<4x16xbf16>, vector<8x16xf32> -> vector<8x16xf32>
    %10 = arith.addf %5, %9 : vector<8x16xf32>
    %c2 = arith.constant 2 : index
    %c0_8 = arith.constant 0 : index
    %c0_9 = arith.constant 0 : index
    %11 = vector.load %arg3[%c2, %c0_8, %c0_9] : memref<3x8x4xbf16, #tpu.memory_space<vmem>>, vector<1x8x4xbf16>
    %12 = vector.shape_cast %11 : vector<1x8x4xbf16> to vector<8x4xbf16>
    %13 = vector.extract_strided_slice %1 {offsets = [0, 2], sizes = [4, 16], strides = [1, 1]} : vector<4x144xbf16> to vector<4x16xbf16>
    %cst_10 = arith.constant dense<0.000000e+00> : vector<8x16xf32>
    %14 = tpu.matmul %12, %13, %cst_10 {dimension_numbers = #tpu.dot_dimension_numbers<[1], [0], [0], [1], [0, 0, 1, 1], [], []>} : vector<8x4xbf16>, vector<4x16xbf16>, vector<8x16xf32> -> vector<8x16xf32>
    %15 = arith.addf %10, %14 : vector<8x16xf32>
    %c0_11 = arith.constant 0 : index
    %c0_12 = arith.constant 0 : index
    %16 = vector.load %arg4[%c0_11, %c0_12] : memref<8x1xf32, #tpu.memory_space<vmem>>, vector<8x1xf32>
    %17 = vector.broadcast %16 : vector<8x1xf32> to vector<8x16xf32>
    %18 = arith.addf %15, %17 : vector<8x16xf32>
    %cst_13 = arith.constant 0.000000e+00 : f32
    %19 = vector.broadcast %cst_13 : f32 to vector<8x16xf32>
    %20 = arith.maximumf %18, %19 : vector<8x16xf32>
    %c0_14 = arith.constant 0 : index
    %c0_15 = arith.constant 0 : index
    %c0_16 = arith.constant 0 : index
    %21 = vector.load %arg5[%c0_14, %c0_15, %c0_16] : memref<1x8x16xf32, #tpu.memory_space<vmem>>, vector<1x8x16xf32>
    %22 = vector.shape_cast %21 : vector<1x8x16xf32> to vector<8x16xf32>
    %23 = vector.shape_cast %20 : vector<8x16xf32> to vector<1x8x16xf32>
    tpu.vector_store %arg5[%c0_14, %c0_15, %c0_16], %23 {strides = array<i32>} : memref<1x8x16xf32, #tpu.memory_space<vmem>>, vector<1x8x16xf32>,
    return
  }
  func.func @transform_0(%arg0: i32, %arg1: i32) -> (i32, i32, i32) {
    %c0_i32 = arith.constant 0 : i32
    %c0_i32_0 = arith.constant 0 : i32
    %c0_i32_1 = arith.constant 0 : i32
    return %arg0, %c0_i32, %c0_i32_0 : i32, i32, i32
  }
  func.func @transform_1(%arg0: i32, %arg1: i32) -> (i32, i32, i32) {
    %c0_i32 = arith.constant 0 : i32
    %c0_i32_0 = arith.constant 0 : i32
    %c0_i32_1 = arith.constant 0 : i32
    %c0_i32_2 = arith.constant 0 : i32
    return %c0_i32, %c0_i32_0, %c0_i32_1 : i32, i32, i32
  }
  func.func @transform_2(%arg0: i32, %arg1: i32) -> (i32, i32) {
    %c0_i32 = arith.constant 0 : i32
    %c0_i32_0 = arith.constant 0 : i32
    %c0_i32_1 = arith.constant 0 : i32
    return %c0_i32, %c0_i32_0 : i32, i32
  }
  func.func @transform_3(%arg0: i32, %arg1: i32) -> (i32, i32, i32) {
    %c0_i32 = arith.constant 0 : i32
    %c0_i32_0 = arith.constant 0 : i32
    return %arg0, %c0_i32, %arg1 : i32, i32, i32
  }
}

</mosaic_0001>

<llo_original>
// kernel: tpu_custom_call.1
$region0: #{tpu_custom_call.1}
  #allocation0 [shape = 'u32[]', space=smem, size = 0x4, offset = 0x4, fixed_abs, tag = 'smem constant byte address 0x4 - core index']
  #allocation1 [shape = 'u32[144,128]{1,0:T(1,128)}', space=vmem, size = 0x12000, scoped, tag = 'internal scratch']
  %s0 = inlined_call_operand.vmem [shape: bf16[2,4,144], index: 0, kind: input, shape index: {}]
  %s1 = inlined_call_operand.vmem [shape: bf16[3,8,4], index: 1, kind: input, shape index: {}]
  %s2 = inlined_call_operand.vmem [shape: f32[8,1], index: 2, kind: input, shape index: {}]
  %s3 = inlined_call_operand.hbm [shape: f32[2,8,16], index: 3, kind: output, shape index: {}]
  %s4 = sld [smem:[#allocation0]]
  $region45: #{tpu_custom_call.1} parent=0
    _
  %s6 = ssub.s32 1, %s4
  %s7 = scalar_select 0, %s6, %s4
  $region1: #{tpu_custom_call.1} parent=0
    #allocation2 [shape = 'u8[8192]{0}', space=vmem, size = 0x2000, scoped, tag = 'output window, operand 0']
    #allocation3 [shape = 's32[2]{0}', space=sflag, size = 0x8, scoped, tag = 'scoped memory for tpu_custom_call.1']
    %8 = vsyncpa [#allocation3], 0
    %s9 = scalar_lea.sflag [#allocation3], 1
    %10 = vsyncpa %s9, 0
    loop: start=0, step=1, limit=4
    $region2: #{tpu_custom_call.1} parent=1 // loop_pre_header
      _
    $region3: #{tpu_custom_call.1} parent=1 // loop_header
      %s12 = sphi 0, %s16
      %p13 = scmp.ge.s32.totalorder %s12, 4
      %s19 = sphi 0, %s31
      %s20 = sphi 0, %s27
      %s21 = sphi 0, %s19
      %s22 = sphi 0, %s20
      %s23 = sphi 0, %s21
      %s24 = sphi 0, %s22
      %s34 = sphi 0, %s36
      %s37 = sphi 0, %s34
      %s38 = sphi 0, %s37
      %s54 = sphi 0, %s38
      %s58 = sphi 0, %s58
      %s60 = sphi 0, %s58
      %s61 = sphi 0, %s60
      %s75 = sphi 0, %s61
      %s79 = sphi 0, %s79
      %s81 = sphi 0, %s79
      %s82 = sphi 0, %s81
      %s96 = sphi 0, %s82
      %s104 = sphi 0, %s106
      %s107 = sphi 0, %s104
      %s108 = sphi 0, %s107
      %s124 = sphi 0, %s108
    $region4: #{tpu_custom_call.1} parent=1 // loop_header_branch
      %15 = sbr.rel (%p13) target = $region8
    $region5: #{tpu_custom_call.1} parent=1 // loop_body
      %s17 = ssub.s32 %s12, 1
      %s18 = ssub.s32 %s12, 2
      %s25 = sadd.s32 1, %s20
      %p26 = scmp.ge.s32.totalorder %s25, 1
      %s27 = scalar_select %p26, 0, %s25
      %s28 = sadd.s32 1, %s19
      %s29 = scalar_select %p26, %s28, %s19
      %p30 = scmp.ge.s32.totalorder %s29, 2
      %s31 = scalar_select %p30, 0, %s29
      %s32 = ssub.s32 %s19, %s31
      %p33 = scmp.eq.s32.totalorder %s32, 0
      %s35 = sadd.s32 %s34, 1
      %s36 = scalar_select %p33, %s34, %s35
      %p39 = pneg %p33
      %p40 = scmp.eq.s32.totalorder %s12, 1
      %p41 = por %p39, %p40
      %p42 = scmp.ne.s32.totalorder %s34, %s37
      %p43 = scmp.eq.s32.totalorder %s12, 0
      %p44 = por %p42, %p43
      %p45 = scmp.ne.s32.totalorder %s34, %s37
      %p46 = scmp.eq.s32.totalorder %s17, 1
      %p47 = por %p45, %p46
      %p48 = scmp.ne.s32.totalorder %s37, %s38
      %p49 = scmp.eq.s32.totalorder %s17, 0
      %p50 = por %p48, %p49
      %p51 = scmp.ne.s32.totalorder %s37, %s38
      %p52 = scmp.eq.s32.totalorder %s18, 1
      %p53 = por %p51, %p52
      %p55 = scmp.ne.s32.totalorder %s38, %s54
      %p56 = scmp.eq.s32.totalorder %s18, 0
      %p57 = por %p55, %p56
      %s59 = sadd.s32 %s58, 1
      %p62 = scmp.eq.s32.totalorder %s12, 1
      %p63 = scmp.ne.s32.totalorder %s58, %s60
      %p64 = scmp.eq.s32.totalorder %s12, 0
      %p65 = por %p63, %p64
      %p66 = scmp.ne.s32.totalorder %s58, %s60
      %p67 = scmp.eq.s32.totalorder %s17, 1
      %p68 = por %p66, %p67
      %p69 = scmp.ne.s32.totalorder %s60, %s61
      %p70 = scmp.eq.s32.totalorder %s17, 0
      %p71 = por %p69, %p70
      %p72 = scmp.ne.s32.totalorder %s60, %s61
      %p73 = scmp.eq.s32.totalorder %s18, 1
      %p74 = por %p72, %p73
      %p76 = scmp.ne.s32.totalorder %s61, %s75
      %p77 = scmp.eq.s32.totalorder %s18, 0
      %p78 = por %p76, %p77
      %s80 = sadd.s32 %s79, 1
      %p83 = scmp.eq.s32.totalorder %s12, 1
      %p84 = scmp.ne.s32.totalorder %s79, %s81
      %p85 = scmp.eq.s32.totalorder %s12, 0
      %p86 = por %p84, %p85
      %p87 = scmp.ne.s32.totalorder %s79, %s81
      %p88 = scmp.eq.s32.totalorder %s17, 1
      %p89 = por %p87, %p88
      %p90 = scmp.ne.s32.totalorder %s81, %s82
      %p91 = scmp.eq.s32.totalorder %s17, 0
      %p92 = por %p90, %p91
      %p93 = scmp.ne.s32.totalorder %s81, %s82
      %p94 = scmp.eq.s32.totalorder %s18, 1
      %p95 = por %p93, %p94
      %p97 = scmp.ne.s32.totalorder %s82, %s96
      %p98 = scmp.eq.s32.totalorder %s18, 0
      %p99 = por %p97, %p98
      %s100 = ssub.s32 %s19, %s31
      %s101 = ssub.s32 %s20, %s27
      %s102 = sor.u32 %s100, %s101
      %p103 = scmp.eq.s32.totalorder %s102, 0
      %s105 = sadd.s32 %s104, 1
      %s106 = scalar_select %p103, %s104, %s105
      %p109 = pneg %p103
      %p110 = scmp.eq.s32.totalorder %s12, 1
      %p111 = por %p109, %p110
      %p112 = scmp.ne.s32.totalorder %s104, %s107
      %p113 = scmp.eq.s32.totalorder %s12, 0
      %p114 = por %p112, %p113
      %p115 = scmp.ne.s32.totalorder %s104, %s107
      %p116 = scmp.eq.s32.totalorder %s17, 1
      %p117 = por %p115, %p116
      %p118 = scmp.ne.s32.totalorder %s107, %s108
      %p119 = scmp.eq.s32.totalorder %s17, 0
      %p120 = por %p118, %p119
      %p121 = scmp.ne.s32.totalorder %s107, %s108
      %p122 = scmp.eq.s32.totalorder %s18, 1
      %p123 = por %p121, %p122
      %p125 = scmp.ne.s32.totalorder %s108, %s124
      %p126 = scmp.eq.s32.totalorder %s18, 0
      %p127 = por %p125, %p126
      %p128 = scmp.le.s32.totalorder 1, %s12
      %p129 = scmp.lt.s32.totalorder %s12, 3
      %p130 = pnand %p128, %p129
      %p131 = pneg %p130
      // Predicated region
      $region9: #{tpu_custom_call.1} parent=5 // pred_check
        _
      $region10: #{tpu_custom_call.1} parent=5 // pred_check_branch
        %133 = sbr.rel (%p130) target = $region12
      $region11: #{tpu_custom_call.1} parent=5 // pred_region
        %s134 = ssub.s32 %s12, 1
        // Predicated region
        $region13: #{tpu_custom_call.1} parent=11 // pred_check
          %p135 = pneg %p71
        $region14: #{tpu_custom_call.1} parent=11 // pred_check_branch
          %137 = sbr.rel (%p135) target = $region16
        $region15: #{tpu_custom_call.1} parent=11 // pred_region
          _
        $region16: #{tpu_custom_call.1} parent=11 // pred_fallthru
          _
        // Predicated region
        $region17: #{tpu_custom_call.1} parent=11 // pred_check
          %p138 = pneg %p92
        $region18: #{tpu_custom_call.1} parent=11 // pred_check_branch
          %140 = sbr.rel (%p138) target = $region20
        $region19: #{tpu_custom_call.1} parent=11 // pred_region
          _
        $region20: #{tpu_custom_call.1} parent=11 // pred_fallthru
          _
      $region12: #{tpu_custom_call.1} parent=5 // pred_fallthru
        _
      %p141 = scmp.lt.s32.totalorder %s12, 2
      // Predicated region
      $region21: #{tpu_custom_call.1} parent=5 // pred_check
        %p142 = pneg %p141
      $region22: #{tpu_custom_call.1} parent=5 // pred_check_branch
        %144 = sbr.rel (%p142) target = $region24
      $region23: #{tpu_custom_call.1} parent=5 // pred_region
        // Predicated region
        $region25: #{tpu_custom_call.1} parent=23 // pred_check
          %p145 = pneg %p44
        $region26: #{tpu_custom_call.1} parent=23 // pred_check_branch
          %147 = sbr.rel (%p145) target = $region28
        $region27: #{tpu_custom_call.1} parent=23 // pred_region
          %p148 = scmp.lt.s32.totalorder %s19, 1
          %s149 = scalar_select %p148, %s19, 1
          %s150 = smul.addr %s149, 2
          %s151 = smul.addr %s150, 2
          %s152 = scalar_lea.vmem %s0, %s151
        $region28: #{tpu_custom_call.1} parent=23 // pred_fallthru
          _
      $region24: #{tpu_custom_call.1} parent=5 // pred_fallthru
        _
      %p153 = scmp.le.s32.totalorder 1, %s12
      %p154 = scmp.lt.s32.totalorder %s12, 3
      %p155 = pnand %p153, %p154
      %p156 = pneg %p155
      // Predicated region
      $region29: #{tpu_custom_call.1} parent=5 // pred_check
        _
      $region30: #{tpu_custom_call.1} parent=5 // pred_check_branch
        %158 = sbr.rel (%p155) target = $region32
      $region31: #{tpu_custom_call.1} parent=5 // pred_region
        %s159 = ssub.s32 %s12, 1
        %p160 = scmp.lt.s32.totalorder %s21, 1
        %s161 = scalar_select %p160, %s21, 1
        %s162 = smul.addr %s161, 2
        %s163 = smul.addr %s162, 2
        %s164 = scalar_lea.vmem %s0, %s163
        %p165 = pneg %p50
        %p166 = pneg %p47
        %p167 = pneg %p71
        %p168 = pneg %p68
        %p169 = pneg %p92
        %p170 = pneg %p89
        %p171 = pneg %p120
        %p172 = pneg %p117
        %s173 = sand.u32 %s107, 1
        %s174 = scalar_lea.sflag [#allocation3], %s173
        %s175 = sand.u32 %s107, 1
        %s176 = smul.addr %s175, 8
        %s177 = scalar_lea.vmem [#allocation2], %s176
        %p178 = scmp.lt.s32.totalorder %s21, 1
        %s179 = scalar_select %p178, %s21, 1
        %s180 = smul.addr %s179, 2
        %s181 = smul.addr %s180, 2
        %s182 = scalar_lea.vmem %s0, %s181
        %v184 = vld [vmem:[%s182] sm:$0xf]
        %v185 = vld [vmem:[%s1] sm:$0xf]
        %s186 = scalar_lea.vmem %s1, 4
        %v187 = vld [vmem:[%s186] sm:$0xf]
        %v190 = vunpack.c.l.s4 1983009808
        %v191 = vunpack.c.0.s8 %v190
        %v192 = vlaneseq
        %v193 = vshrl.u32 %v192, 7
        %v194 = vsub.s32 %v191, %v193
        %v195 = vrot.slane %v184, %v194
        %196 = vrot.lane.b32.xlu0 %v195, 127
        %v197 = vpop.permute.xlu0 %196
        %vm198 = vcmask 31744
        %v200 = vsel %vm198, %v187, 0
        %vm202 = vcmask 1041408
        %v204 = vsel %vm202, %v197, 0
        %206 = vmatprep.subr.bf16.mxu0 0
        %207 = vmatpush1.bf16.msra.mxu0 %v204
        %208 = vmatprep.subr.bf16.mxu0 0
        %209 = vmatpush1.bf16.msra.mxu0 0
        %210 = vmatprep.subr.bf16.mxu0 0
        %211 = vmatpush1.bf16.msra.mxu0 0
        %212 = vmatprep.subr.bf16.mxu0 0
        %213 = vmatpush1.bf16.msra.mxu0 0
        %214 = vmatprep.subr.bf16.mxu0 0
        %215 = vmatpush1.bf16.msra.mxu0 0
        %216 = vmatprep.subr.bf16.mxu0 0
        %217 = vmatpush1.bf16.msra.mxu0 0
        %218 = vmatprep.subr.bf16.mxu0 0
        %219 = vmatpush1.bf16.msra.mxu0 0
        %220 = vmatprep.subr.bf16.mxu0 0
        %221 = vmatpush1.bf16.msra.mxu0 0
        %222 = vmatprep.subr.bf16.mxu0 0
        %223 = vmatpush1.bf16.msra.mxu0 0
        %224 = vmatprep.subr.bf16.mxu0 0
        %225 = vmatpush1.bf16.msra.mxu0 0
        %226 = vmatprep.subr.bf16.mxu0 0
        %227 = vmatpush1.bf16.msra.mxu0 0
        %228 = vmatprep.subr.bf16.mxu0 0
        %229 = vmatpush1.bf16.msra.mxu0 0
        %230 = vmatprep.subr.bf16.mxu0 0
        %231 = vmatpush1.bf16.msra.mxu0 0
        %232 = vmatprep.subr.bf16.mxu0 0
        %233 = vmatpush1.bf16.msra.mxu0 0
        %234 = vmatprep.subr.bf16.mxu0 0
        %235 = vmatpush1.bf16.msra.mxu0 0
        %236 = vmatprep.subr.bf16.mxu0 0
        %237 = vmatpush1.bf16.msra.mxu0 0
        %238 = vmatprep.mubr.bf16.mxu0 0
        %239 = vmatmul.mubr.bf16.gmra.mrb[0].mxu0 %v200
        %v240 = vpop.f32.mrb[0].mxu0
        %v241 = vadd.f32 0.0, %v240
        %v242 = vpop.f32.mrb[0].mxu0
        %v243 = vpop.f32.mrb[0].mxu0
        %v244 = vpop.f32.mrb[0].mxu0
        %245 = vdwg.mxu0
        %v247 = vsel %vm198, %v185, 0
        %v250 = vsel %vm202, %v184, 0
        %252 = vmatprep.subr.bf16.mxu0 0
        %253 = vmatpush1.bf16.msra.mxu0 %v250
        %254 = vmatprep.subr.bf16.mxu0 0
        %255 = vmatpush1.bf16.msra.mxu0 0
        %256 = vmatprep.subr.bf16.mxu0 0
        %257 = vmatpush1.bf16.msra.mxu0 0
        %258 = vmatprep.subr.bf16.mxu0 0
        %259 = vmatpush1.bf16.msra.mxu0 0
        %260 = vmatprep.subr.bf16.mxu0 0
        %261 = vmatpush1.bf16.msra.mxu0 0
        %262 = vmatprep.subr.bf16.mxu0 0
        %263 = vmatpush1.bf16.msra.mxu0 0
        %264 = vmatprep.subr.bf16.mxu0 0
        %265 = vmatpush1.bf16.msra.mxu0 0
        %266 = vmatprep.subr.bf16.mxu0 0
        %267 = vmatpush1.bf16.msra.mxu0 0
        %268 = vmatprep.subr.bf16.mxu0 0
        %269 = vmatpush1.bf16.msra.mxu0 0
        %270 = vmatprep.subr.bf16.mxu0 0
        %271 = vmatpush1.bf16.msra.mxu0 0
        %272 = vmatprep.subr.bf16.mxu0 0
        %273 = vmatpush1.bf16.msra.mxu0 0
        %274 = vmatprep.subr.bf16.mxu0 0
        %275 = vmatpush1.bf16.msra.mxu0 0
        %276 = vmatprep.subr.bf16.mxu0 0
        %277 = vmatpush1.bf16.msra.mxu0 0
        %278 = vmatprep.subr.bf16.mxu0 0
        %279 = vmatpush1.bf16.msra.mxu0 0
        %280 = vmatprep.subr.bf16.mxu0 0
        %281 = vmatpush1.bf16.msra.mxu0 0
        %282 = vmatprep.subr.bf16.mxu0 0
        %283 = vmatpush1.bf16.msra.mxu0 0
        %284 = vmatprep.mubr.bf16.mxu0 0
        %285 = vmatmul.mubr.bf16.gmra.mrb[0].mxu0 %v247
        %v286 = vpop.f32.mrb[0].mxu0
        %v287 = vadd.f32 %v241, %v286
        %v288 = vpop.f32.mrb[0].mxu0
        %v289 = vpop.f32.mrb[0].mxu0
        %v290 = vpop.f32.mrb[0].mxu0
        %291 = vdwg.mxu0
        %s292 = scalar_lea.vmem %s1, 8
        %v293 = vld [vmem:[%s292] sm:$0xf]
        %294 = vrot.lane.b32.xlu0 %v195, 126
        %v295 = vpop.permute.xlu0 %294
        %v297 = vsel %vm198, %v293, 0
        %v300 = vsel %vm202, %v295, 0
        %302 = vmatprep.subr.bf16.mxu0 0
        %303 = vmatpush1.bf16.msra.mxu0 %v300
        %304 = vmatprep.subr.bf16.mxu0 0
        %305 = vmatpush1.bf16.msra.mxu0 0
        %306 = vmatprep.subr.bf16.mxu0 0
        %307 = vmatpush1.bf16.msra.mxu0 0
        %308 = vmatprep.subr.bf16.mxu0 0
        %309 = vmatpush1.bf16.msra.mxu0 0
        %310 = vmatprep.subr.bf16.mxu0 0
        %311 = vmatpush1.bf16.msra.mxu0 0
        %312 = vmatprep.subr.bf16.mxu0 0
        %313 = vmatpush1.bf16.msra.mxu0 0
        %314 = vmatprep.subr.bf16.mxu0 0
        %315 = vmatpush1.bf16.msra.mxu0 0
        %316 = vmatprep.subr.bf16.mxu0 0
        %317 = vmatpush1.bf16.msra.mxu0 0
        %318 = vmatprep.subr.bf16.mxu0 0
        %319 = vmatpush1.bf16.msra.mxu0 0
        %320 = vmatprep.subr.bf16.mxu0 0
        %321 = vmatpush1.bf16.msra.mxu0 0
        %322 = vmatprep.subr.bf16.mxu0 0
        %323 = vmatpush1.bf16.msra.mxu0 0
        %324 = vmatprep.subr.bf16.mxu0 0
        %325 = vmatpush1.bf16.msra.mxu0 0
        %326 = vmatprep.subr.bf16.mxu0 0
        %327 = vmatpush1.bf16.msra.mxu0 0
        %328 = vmatprep.subr.bf16.mxu0 0
        %329 = vmatpush1.bf16.msra.mxu0 0
        %330 = vmatprep.subr.bf16.mxu0 0
        %331 = vmatpush1.bf16.msra.mxu0 0
        %332 = vmatprep.subr.bf16.mxu0 0
        %333 = vmatpush1.bf16.msra.mxu0 0
        %334 = vmatprep.mubr.bf16.mxu0 0
        %335 = vmatmul.mubr.bf16.gmra.mrb[0].mxu0 %v297
        %v336 = vpop.f32.mrb[0].mxu0
        %v337 = vadd.f32 0.0, %v336
        %v338 = vpop.f32.mrb[0].mxu0
        %v339 = vpop.f32.mrb[0].mxu0
        %v340 = vpop.f32.mrb[0].mxu0
        %341 = vdwg.mxu0
        %v342 = vadd.f32 %v287, %v337
        %v343 = vld [vmem:[%s2] sm:$0xff]
        %345 = vset.pattern.permute.xlu0 0
        %346 = vperm.xlu0 %345, %v343
        %v347 = vpop.permute.xlu0 %346
        %v349 = vadd.f32 %v342, %v347
        %v350 = vmax.f32 %v349, 0.0
        %vm351 = vcmask 130048
        %352 = vst.msk [vmem:[%s177] sm:$0xff] %vm351, %v350
        %s353 = sand.u32 %s107, 1
        %s354 = scalar_lea.sflag [#allocation3], %s353
        %s355 = sand.u32 %s107, 1
        %s356 = smul.addr %s355, 8
        %s357 = scalar_lea.vmem [#allocation2], %s356
        // Predicated region
        $region33: #{tpu_custom_call.1} parent=31 // pred_check
          %p358 = pneg %p117
        $region34: #{tpu_custom_call.1} parent=31 // pred_check_branch
          %360 = sbr.rel (%p358) target = $region36
        $region35: #{tpu_custom_call.1} parent=31 // pred_region
          %s362 = ssub.s32 128, 128
          %363 = vsyncadd %s354, %s362
          %s364 = sadd.s32 %s22, %s21
          %s365 = smul.addr %s364, 128
          %s366 = scalar_lea.hbm %s3, %s365
          %s368 = sshll.u32 %s357, 4
          %s369 = int_to_ptr.vmem [resolvable:$true] %s368
          %371 = dma.vmem_to_hbm [thread:$0]  %s369, 128, %s366, %s354
        $region36: #{tpu_custom_call.1} parent=31 // pred_fallthru
          _
      $region32: #{tpu_custom_call.1} parent=5 // pred_fallthru
        _
      %p372 = scmp.le.s32.totalorder 2, %s12
      // Predicated region
      $region37: #{tpu_custom_call.1} parent=5 // pred_check
        %p373 = pneg %p372
      $region38: #{tpu_custom_call.1} parent=5 // pred_check_branch
        %375 = sbr.rel (%p373) target = $region40
      $region39: #{tpu_custom_call.1} parent=5 // pred_region
        %s376 = ssub.s32 %s12, 2
        // Predicated region
        $region41: #{tpu_custom_call.1} parent=39 // pred_check
          %p377 = pneg %p123
        $region42: #{tpu_custom_call.1} parent=39 // pred_check_branch
          %379 = sbr.rel (%p377) target = $region44
        $region43: #{tpu_custom_call.1} parent=39 // pred_region
          %s380 = sand.u32 %s108, 1
          %s381 = scalar_lea.sflag [#allocation3], %s380
          %s382 = sand.u32 %s108, 1
          %s383 = smul.addr %s382, 8
          %s384 = scalar_lea.vmem [#allocation2], %s383
          %385 = dma.done %s381, 128
        $region44: #{tpu_custom_call.1} parent=39 // pred_fallthru
          _
      $region40: #{tpu_custom_call.1} parent=5 // pred_fallthru
        _
    $region6: #{tpu_custom_call.1} parent=1 // loop_footer
      %s16 = sadd.s32 1, %s12
    $region7: #{tpu_custom_call.1} parent=1 // loop_footer_branch
      %11 = sbr.rel target = $region3
    $region8: #{tpu_custom_call.1} parent=1 // loop_exit
      _
    %386 = vsyncpa [#allocation3], 1
    %s387 = scalar_lea.sflag [#allocation3], 1
    %388 = vsyncpa %s387, 1

</llo_original>
